<compile_context>
chip_gen: v5e
topology: v5e:2x2
jax: 0.10.0
libtpu: 0.0.40
codegen_flags: <defaults>
</compile_context>

<pallas_src>
import functools

import jax
import jax.numpy as jnp
from jax.experimental import pallas as pl
from jax.experimental.pallas import tpu as pltpu

EPS = 1e-5
LANE = 128


def _round_up(v, m):
    return ((v + m - 1) // m) * m


# --------------------------------------------------------------------------
# Parameter slab layout (all static Python ints).
# --------------------------------------------------------------------------
def make_layout(n_features, n_classes):
    assert n_features % 16 == 0, "n_features must be divisible by 16"
    hidden = [n_features // 2, n_features // 4, n_features // 8, n_features // 16]
    n_out_pad = _round_up(max(n_classes, 1), LANE)
    in_dims = [n_features] + hidden               # K of each of the 5 linears
    out_dims = hidden + [n_classes]               # true N of each linear
    out_dims_pad = hidden + [n_out_pad]           # padded N (only last is padded)
    lane_w = _round_up(max(out_dims_pad), LANE)   # slab lane width

    w_offs, r = [], 0
    for k in in_dims:                             # weight row ranges (8-aligned
        w_offs.append(r)                          # because dims are mult. of 4
        r += k                                    # and the first is mult. of 16)
    vec_row0 = r                                  # 13 vector rows follow
    rows_pad = _round_up(r + 3 * 4 + 1, 8)

    return dict(in_dims=tuple(in_dims),
                out_dims=tuple(out_dims),
                out_dims_pad=tuple(out_dims_pad),
                w_offs=tuple(w_offs),
                vec_row0=vec_row0,
                n_out_pad=n_out_pad,
                lane_w=lane_w,
                rows_pad=rows_pad)


def make_params(key, n_features, n_classes):
    """Deterministic parameter init mirroring the PyTorch __init__:
    xavier_normal_ Linear weights, zero biases, BN gamma=1 / beta=0.
    Weights are stored as (in_features, out_features) so the kernel hot path
    is a plain `h @ W + b` on the MXU."""
    dims = [n_features, n_features // 2, n_features // 4,
            n_features // 8, n_features // 16, n_classes]
    params = []
    keys = jax.random.split(key, 5)
    for i in range(5):
        fan_in, fan_out = dims[i], dims[i + 1]
        std = (2.0 / (fan_in + fan_out)) ** 0.5   # xavier normal, gain=1
        w = std * jax.random.normal(keys[i], (fan_in, fan_out), dtype=jnp.float32)
        b = jnp.zeros((1, fan_out), dtype=jnp.float32)
        params.append(w)
        params.append(b)
        if i < 4:  # BatchNorm after the first 4 Linear+ReLU blocks
            params.append(jnp.ones((1, fan_out), dtype=jnp.float32))   # gamma
            params.append(jnp.zeros((1, fan_out), dtype=jnp.float32))  # beta
    return params


def pack_params(params, n_features, n_classes):
    """ONE-TIME packing of the per-layer params into a single (rows, lanes)
    f32 slab (also performs the final-layer lane padding once, not per call)."""
    L = make_layout(n_features, n_classes)
    (w1, b1, g1, be1,
     w2, b2, g2, be2,
     w3, b3, g3, be3,
     w4, b4, g4, be4,
     w5, b5) = params
    weights = [w1, w2, w3, w4, w5]
    vectors = [b1, g1, be1, b2, g2, be2, b3, g3, be3, b4, g4, be4, b5]

    slab = jnp.zeros((L["rows_pad"], L["lane_w"]), jnp.float32)
    for i, w in enumerate(weights):
        r0, k, n = L["w_offs"][i], L["in_dims"][i], L["out_dims"][i]
        slab = slab.at[r0:r0 + k, :n].set(w.astype(jnp.float32))
    for j, v in enumerate(vectors):
        v = jnp.asarray(v, jnp.float32).reshape(-1)
        slab = slab.at[L["vec_row0"] + j, :v.shape[0]].set(v)
    return slab


# --------------------------------------------------------------------------
# Fused kernel: 4x (Linear -> ReLU -> BatchNorm1d) + final Linear.
# --------------------------------------------------------------------------
def mlp_kernel(x_ref, p_ref, o_ref, *, layout, use_bf16_matmul, one_pass_bn):
    in_dims = layout["in_dims"]
    out_pad = layout["out_dims_pad"]
    w_offs = layout["w_offs"]
    vr0 = layout["vec_row0"]

    def weight(i):
        r0, k, n = w_offs[i], in_dims[i], out_pad[i]
        return p_ref[r0:r0 + k, 0:n]                      # static slice

    def vec(row, n):
        return p_ref[row:row + 1, 0:n]                    # (1, n) static slice

    def linear(h, i, bias_row):
        w = weight(i)
        b = vec(bias_row, out_pad[i])
        if use_bf16_matmul:
            # MXU-friendly bf16 inputs, f32 accumulation (v6e/v7x only).
            h = h.astype(jnp.bfloat16)
            w = w.astype(jnp.bfloat16)
        return jnp.dot(h, w, preferred_element_type=jnp.float32) + b

    h = x_ref[...].astype(jnp.float32)
    for i in range(4):
        n = out_pad[i]
        brow = vr0 + 3 * i
        h = jnp.maximum(linear(h, i, brow), 0.0)          # Linear + ReLU
        g = vec(brow + 1, n)                              # gamma
        be = vec(brow + 2, n)                             # beta
        if one_pass_bn:
            # One pass over h: var = E[h^2]-mu^2, mu folded into the shift.
            mu = jnp.mean(h, axis=0, keepdims=True)
            ex2 = jnp.mean(h * h, axis=0, keepdims=True)
            var = jnp.maximum(ex2 - mu * mu, 0.0)         # biased variance
            scale = g * jax.lax.rsqrt(var + EPS)          # rsqrt -> EUP
            h = h * scale + (be - mu * scale)
        else:
            # Two-pass (bit-closest to the PyTorch reference form).
            mu = jnp.mean(h, axis=0, keepdims=True)
            diff = h - mu
            var = jnp.mean(diff * diff, axis=0, keepdims=True)
            scale = g * jax.lax.rsqrt(var + EPS)
            h = diff * scale + be
    # Final Linear into the lane-padded (B, 128k) output slab (padded weight /
    # bias columns are exactly zero, so padded lanes hold zeros).
    o_ref[...] = linear(h, 4, vr0 + 12)


# --------------------------------------------------------------------------
# Wrapper (jitted so the trailing [:, :n_classes] slice fuses with the call).
# --------------------------------------------------------------------------
def _forward_impl(x, packed, n_features, n_classes, use_bf16_matmul, one_pass_bn):
    B, F = x.shape
    assert F == n_features
    L = make_layout(n_features, n_classes)
    n_out_pad = L["n_out_pad"]

    # --- generation-aware VMEM budget (trace-time hardware query) ---
    try:
        phys_vmem = int(pltpu.get_tpu_info().vmem_capacity_bytes)
    except Exception:                 # pragma: no cover - conservative fallback
        phys_vmem = 64 << 20          # assume v7x-sized (smallest) VMEM
    vmem_budget = min(phys_vmem * 3 // 4, 100 << 20)   # ~96MiB v5e/v6e, ~48MiB v7x

    # --- lane-padding-aware footprint check (whole batch resident) ---
    Bp = _round_up(B, 8)
    max_act_lanes = max(_round_up(F, LANE), _round_up(F // 2, LANE), n_out_pad)
    act_tile = 4 * Bp * max_act_lanes                    # one (B, W) f32 tile
    param_bytes = 4 * L["rows_pad"] * L["lane_w"]
    approx_vmem = (param_bytes
                   + 4 * Bp * _round_up(F, LANE)         # x (lane padded)
                   + 4 * Bp * n_out_pad                  # padded output slab
                   + 6 * act_tile)                       # concurrently live temps
    assert approx_vmem < vmem_budget, (
        "batch too large for the fused whole-batch kernel on this TPU "
        "generation; needs the batch-tiled global-BN path (see TODO at top)")

    # --- cost estimate: tiny, mostly memory/overhead bound; tell XLA so ---
    dims = list(L["in_dims"]) + [n_out_pad]
    matmul_flops = 2 * B * sum(dims[i] * dims[i + 1] for i in range(5))
    bn_relu_flops = 7 * B * sum(L["out_dims"][:4])
    cost = pl.CostEstimate(
        flops=int(matmul_flops + bn_relu_flops),
        transcendentals=int(sum(L["out_dims"][:4])),     # one rsqrt / feature
        bytes_accessed=int(x.size * 4 + B * n_out_pad * 4 + param_bytes))

    vmem_spec = pl.BlockSpec(memory_space=pltpu.MemorySpace.VMEM)
    out_padded = pl.pallas_call(
        functools.partial(mlp_kernel, layout=L,
                          use_bf16_matmul=use_bf16_matmul,
                          one_pass_bn=one_pass_bn),
        out_shape=jax.ShapeDtypeStruct((B, n_out_pad), jnp.float32),
        in_specs=[vmem_spec, vmem_spec],
        out_specs=vmem_spec,
        compiler_params=pltpu.CompilerParams(vmem_limit_bytes=vmem_budget),
        cost_estimate=cost,
    )(x, packed)
    # Slice fuses under this jit (no standalone dispatch).
    return out_padded[:, :n_classes]


_forward_jit = jax.jit(_forward_impl, static_argnums=(2, 3, 4, 5))


def iqm_mlp2_forward(x, packed_params, n_features, n_classes, *,
                     use_bf16_matmul=False, one_pass_bn=True):
    # use_bf16_matmul: keep False on v5e (no bf16 VPU/EUP); consider True on
    # v6e/v7x at large batch (matmul accumulation & BN stats remain f32).
    return _forward_jit(x, packed_params, n_features, n_classes,
                        use_bf16_matmul, one_pass_bn)


# --------------------------------------------------------------------------
# Pure-JAX reference (PyTorch training-mode BN semantics) for validation.
# --------------------------------------------------------------------------
def reference_forward(x, params):
    (w1, b1, g1, be1,
     w2, b2, g2, be2,
     w3, b3, g3, be3,
     w4, b4, g4, be4,
     w5, b5) = params

    def block(h, w, b, g, be):
        h = jnp.maximum(h @ w + b, 0.0)
        mu = jnp.mean(h, axis=0, keepdims=True)
        var = jnp.mean((h - mu) ** 2, axis=0, keepdims=True)
        return (h - mu) / jnp.sqrt(var + EPS) * g + be

    h = block(x, w1, b1, g1, be1)
    h = block(h, w2, b2, g2, be2)
    h = block(h, w3, b3, g3, be3)
    h = block(h, w4, b4, g4, be4)
    return h @ w5 + b5


if __name__ == "__main__":
    n_features = 64   # must be divisible by 16 (n/2, n/4, n/8, n/16 hidden dims)
    n_classes = 3
    batch = 8

    key = jax.random.PRNGKey(0)
    kx, kp = jax.random.split(key)
    x = jax.random.normal(kx, (batch, n_features), dtype=jnp.float32)

    params = make_params(kp, n_features, n_classes)
    packed = pack_params(params, n_features, n_classes)   # one-time param prep

    out = iqm_mlp2_forward(x, packed, n_features, n_classes)
    jax.block_until_ready(out)
    assert out.shape == (batch, n_classes)

    ref = reference_forward(x, params)
    err = float(jnp.max(jnp.abs(out - ref)))
    assert err < 1e-3, f"kernel/reference mismatch: max abs err = {err}"

    print("KERNEL_OK")
</pallas_src>

<mosaic_0001>
module attributes {stable_mosaic.version = 11 : i64} {
  func.func @mlp_kernel(%arg0: memref<8x64xf32, #tpu.memory_space<vmem>>, %arg1: memref<144x128xf32, #tpu.memory_space<vmem>>, %arg2: memref<8x128xf32, #tpu.memory_space<vmem>>) attributes {dimension_semantics = [], scalar_prefetch = 0 : i64, scratch_operands = 0 : i64, tpu.core_type = #tpu.core_type<tc>} {
    %c0 = arith.constant 0 : index
    %c0_0 = arith.constant 0 : index
    %0 = vector.load %arg0[%c0, %c0_0] : memref<8x64xf32, #tpu.memory_space<vmem>>, vector<8x64xf32>
    %c0_1 = arith.constant 0 : index
    %c0_2 = arith.constant 0 : index
    %1 = vector.load %arg1[%c0_1, %c0_2] : memref<144x128xf32, #tpu.memory_space<vmem>>, vector<64x32xf32>
    %c124 = arith.constant 124 : index
    %c0_3 = arith.constant 0 : index
    %2 = vector.load %arg1[%c124, %c0_3] : memref<144x128xf32, #tpu.memory_space<vmem>>, vector<1x32xf32>
    %cst = arith.constant dense<0.000000e+00> : vector<8x32xf32>
    %3 = tpu.matmul %0, %1, %cst {dimension_numbers = #tpu.dot_dimension_numbers<[1], [0], [0], [1], [0, 0, 1, 1], [], []>} : vector<8x64xf32>, vector<64x32xf32>, vector<8x32xf32> -> vector<8x32xf32>
    %4 = vector.broadcast %2 : vector<1x32xf32> to vector<8x32xf32>
    %5 = arith.addf %3, %4 : vector<8x32xf32>
    %cst_4 = arith.constant 0.000000e+00 : f32
    %6 = vector.broadcast %cst_4 : f32 to vector<8x32xf32>
    %7 = arith.maximumf %5, %6 : vector<8x32xf32>
    %c125 = arith.constant 125 : index
    %c0_5 = arith.constant 0 : index
    %8 = vector.load %arg1[%c125, %c0_5] : memref<144x128xf32, #tpu.memory_space<vmem>>, vector<1x32xf32>
    %c126 = arith.constant 126 : index
    %c0_6 = arith.constant 0 : index
    %9 = vector.load %arg1[%c126, %c0_6] : memref<144x128xf32, #tpu.memory_space<vmem>>, vector<1x32xf32>
    %cst_7 = arith.constant dense<0.000000e+00> : vector<32xf32>
    %10 = vector.multi_reduction <add>, %7, %cst_7 [0] : vector<8x32xf32> to vector<32xf32>
    %11 = vector.shape_cast %10 : vector<32xf32> to vector<1x32xf32>
    %cst_8 = arith.constant 8.000000e+00 : f32
    %12 = vector.broadcast %cst_8 : f32 to vector<1x32xf32>
    %13 = arith.divf %11, %12 : vector<1x32xf32>
    %14 = arith.mulf %7, %7 : vector<8x32xf32>
    %cst_9 = arith.constant dense<0.000000e+00> : vector<32xf32>
    %15 = vector.multi_reduction <add>, %14, %cst_9 [0] : vector<8x32xf32> to vector<32xf32>
    %16 = vector.shape_cast %15 : vector<32xf32> to vector<1x32xf32>
    %cst_10 = arith.constant 8.000000e+00 : f32
    %17 = vector.broadcast %cst_10 : f32 to vector<1x32xf32>
    %18 = arith.divf %16, %17 : vector<1x32xf32>
    %19 = arith.mulf %13, %13 : vector<1x32xf32>
    %20 = arith.subf %18, %19 : vector<1x32xf32>
    %cst_11 = arith.constant 0.000000e+00 : f32
    %21 = vector.broadcast %cst_11 : f32 to vector<1x32xf32>
    %22 = arith.maximumf %20, %21 : vector<1x32xf32>
    %cst_12 = arith.constant 9.99999974E-6 : f32
    %23 = vector.broadcast %cst_12 : f32 to vector<1x32xf32>
    %24 = arith.addf %22, %23 : vector<1x32xf32>
    %25 = math.rsqrt %24 : vector<1x32xf32>
    %26 = arith.mulf %8, %25 : vector<1x32xf32>
    %27 = vector.broadcast %26 : vector<1x32xf32> to vector<8x32xf32>
    %28 = arith.mulf %7, %27 : vector<8x32xf32>
    %29 = arith.mulf %13, %26 : vector<1x32xf32>
    %30 = arith.subf %9, %29 : vector<1x32xf32>
    %31 = vector.broadcast %30 : vector<1x32xf32> to vector<8x32xf32>
    %32 = arith.addf %28, %31 : vector<8x32xf32>
    %c64 = arith.constant 64 : index
    %c0_13 = arith.constant 0 : index
    %33 = vector.load %arg1[%c64, %c0_13] : memref<144x128xf32, #tpu.memory_space<vmem>>, vector<32x16xf32>
    %c127 = arith.constant 127 : index
    %c0_14 = arith.constant 0 : index
    %34 = vector.load %arg1[%c127, %c0_14] : memref<144x128xf32, #tpu.memory_space<vmem>>, vector<1x16xf32>
    %cst_15 = arith.constant dense<0.000000e+00> : vector<8x16xf32>
    %35 = tpu.matmul %32, %33, %cst_15 {dimension_numbers = #tpu.dot_dimension_numbers<[1], [0], [0], [1], [0, 0, 1, 1], [], []>} : vector<8x32xf32>, vector<32x16xf32>, vector<8x16xf32> -> vector<8x16xf32>
    %36 = vector.broadcast %34 : vector<1x16xf32> to vector<8x16xf32>
    %37 = arith.addf %35, %36 : vector<8x16xf32>
    %cst_16 = arith.constant 0.000000e+00 : f32
    %38 = vector.broadcast %cst_16 : f32 to vector<8x16xf32>
    %39 = arith.maximumf %37, %38 : vector<8x16xf32>
    %c128 = arith.constant 128 : index
    %c0_17 = arith.constant 0 : index
    %40 = vector.load %arg1[%c128, %c0_17] : memref<144x128xf32, #tpu.memory_space<vmem>>, vector<1x16xf32>
    %c129 = arith.constant 129 : index
    %c0_18 = arith.constant 0 : index
    %41 = vector.load %arg1[%c129, %c0_18] : memref<144x128xf32, #tpu.memory_space<vmem>>, vector<1x16xf32>
    %cst_19 = arith.constant dense<0.000000e+00> : vector<16xf32>
    %42 = vector.multi_reduction <add>, %39, %cst_19 [0] : vector<8x16xf32> to vector<16xf32>
    %43 = vector.shape_cast %42 : vector<16xf32> to vector<1x16xf32>
    %cst_20 = arith.constant 8.000000e+00 : f32
    %44 = vector.broadcast %cst_20 : f32 to vector<1x16xf32>
    %45 = arith.divf %43, %44 : vector<1x16xf32>
    %46 = arith.mulf %39, %39 : vector<8x16xf32>
    %cst_21 = arith.constant dense<0.000000e+00> : vector<16xf32>
    %47 = vector.multi_reduction <add>, %46, %cst_21 [0] : vector<8x16xf32> to vector<16xf32>
    %48 = vector.shape_cast %47 : vector<16xf32> to vector<1x16xf32>
    %cst_22 = arith.constant 8.000000e+00 : f32
    %49 = vector.broadcast %cst_22 : f32 to vector<1x16xf32>
    %50 = arith.divf %48, %49 : vector<1x16xf32>
    %51 = arith.mulf %45, %45 : vector<1x16xf32>
    %52 = arith.subf %50, %51 : vector<1x16xf32>
    %cst_23 = arith.constant 0.000000e+00 : f32
    %53 = vector.broadcast %cst_23 : f32 to vector<1x16xf32>
    %54 = arith.maximumf %52, %53 : vector<1x16xf32>
    %cst_24 = arith.constant 9.99999974E-6 : f32
    %55 = vector.broadcast %cst_24 : f32 to vector<1x16xf32>
    %56 = arith.addf %54, %55 : vector<1x16xf32>
    %57 = math.rsqrt %56 : vector<1x16xf32>
    %58 = arith.mulf %40, %57 : vector<1x16xf32>
    %59 = vector.broadcast %58 : vector<1x16xf32> to vector<8x16xf32>
    %60 = arith.mulf %39, %59 : vector<8x16xf32>
    %61 = arith.mulf %45, %58 : vector<1x16xf32>
    %62 = arith.subf %41, %61 : vector<1x16xf32>
    %63 = vector.broadcast %62 : vector<1x16xf32> to vector<8x16xf32>
    %64 = arith.addf %60, %63 : vector<8x16xf32>
    %c96 = arith.constant 96 : index
    %c0_25 = arith.constant 0 : index
    %65 = vector.load %arg1[%c96, %c0_25] : memref<144x128xf32, #tpu.memory_space<vmem>>, vector<16x8xf32>
    %c130 = arith.constant 130 : index
    %c0_26 = arith.constant 0 : index
    %66 = vector.load %arg1[%c130, %c0_26] : memref<144x128xf32, #tpu.memory_space<vmem>>, vector<1x8xf32>
    %cst_27 = arith.constant dense<0.000000e+00> : vector<8x8xf32>
    %67 = tpu.matmul %64, %65, %cst_27 {dimension_numbers = #tpu.dot_dimension_numbers<[1], [0], [0], [1], [0, 0, 1, 1], [], []>} : vector<8x16xf32>, vector<16x8xf32>, vector<8x8xf32> -> vector<8x8xf32>
    %68 = vector.broadcast %66 : vector<1x8xf32> to vector<8x8xf32>
    %69 = arith.addf %67, %68 : vector<8x8xf32>
    %cst_28 = arith.constant 0.000000e+00 : f32
    %70 = vector.broadcast %cst_28 : f32 to vector<8x8xf32>
    %71 = arith.maximumf %69, %70 : vector<8x8xf32>
    %c131 = arith.constant 131 : index
    %c0_29 = arith.constant 0 : index
    %72 = vector.load %arg1[%c131, %c0_29] : memref<144x128xf32, #tpu.memory_space<vmem>>, vector<1x8xf32>
    %c132 = arith.constant 132 : index
    %c0_30 = arith.constant 0 : index
    %73 = vector.load %arg1[%c132, %c0_30] : memref<144x128xf32, #tpu.memory_space<vmem>>, vector<1x8xf32>
    %cst_31 = arith.constant dense<0.000000e+00> : vector<8xf32>
    %74 = vector.multi_reduction <add>, %71, %cst_31 [0] : vector<8x8xf32> to vector<8xf32>
    %75 = vector.shape_cast %74 : vector<8xf32> to vector<1x8xf32>
    %cst_32 = arith.constant 8.000000e+00 : f32
    %76 = vector.broadcast %cst_32 : f32 to vector<1x8xf32>
    %77 = arith.divf %75, %76 : vector<1x8xf32>
    %78 = arith.mulf %71, %71 : vector<8x8xf32>
    %cst_33 = arith.constant dense<0.000000e+00> : vector<8xf32>
    %79 = vector.multi_reduction <add>, %78, %cst_33 [0] : vector<8x8xf32> to vector<8xf32>
    %80 = vector.shape_cast %79 : vector<8xf32> to vector<1x8xf32>
    %cst_34 = arith.constant 8.000000e+00 : f32
    %81 = vector.broadcast %cst_34 : f32 to vector<1x8xf32>
    %82 = arith.divf %80, %81 : vector<1x8xf32>
    %83 = arith.mulf %77, %77 : vector<1x8xf32>
    %84 = arith.subf %82, %83 : vector<1x8xf32>
    %cst_35 = arith.constant 0.000000e+00 : f32
    %85 = vector.broadcast %cst_35 : f32 to vector<1x8xf32>
    %86 = arith.maximumf %84, %85 : vector<1x8xf32>
    %cst_36 = arith.constant 9.99999974E-6 : f32
    %87 = vector.broadcast %cst_36 : f32 to vector<1x8xf32>
    %88 = arith.addf %86, %87 : vector<1x8xf32>
    %89 = math.rsqrt %88 : vector<1x8xf32>
    %90 = arith.mulf %72, %89 : vector<1x8xf32>
    %91 = vector.broadcast %90 : vector<1x8xf32> to vector<8x8xf32>
    %92 = arith.mulf %71, %91 : vector<8x8xf32>
    %93 = arith.mulf %77, %90 : vector<1x8xf32>
    %94 = arith.subf %73, %93 : vector<1x8xf32>
    %95 = vector.broadcast %94 : vector<1x8xf32> to vector<8x8xf32>
    %96 = arith.addf %92, %95 : vector<8x8xf32>
    %c112 = arith.constant 112 : index
    %c0_37 = arith.constant 0 : index
    %97 = vector.load %arg1[%c112, %c0_37] : memref<144x128xf32, #tpu.memory_space<vmem>>, vector<8x4xf32>
    %c133 = arith.constant 133 : index
    %c0_38 = arith.constant 0 : index
    %98 = vector.load %arg1[%c133, %c0_38] : memref<144x128xf32, #tpu.memory_space<vmem>>, vector<1x4xf32>
    %cst_39 = arith.constant dense<0.000000e+00> : vector<8x4xf32>
    %99 = tpu.matmul %96, %97, %cst_39 {dimension_numbers = #tpu.dot_dimension_numbers<[1], [0], [0], [1], [0, 0, 1, 1], [], []>} : vector<8x8xf32>, vector<8x4xf32>, vector<8x4xf32> -> vector<8x4xf32>
    %100 = vector.broadcast %98 : vector<1x4xf32> to vector<8x4xf32>
    %101 = arith.addf %99, %100 : vector<8x4xf32>
    %cst_40 = arith.constant 0.000000e+00 : f32
    %102 = vector.broadcast %cst_40 : f32 to vector<8x4xf32>
    %103 = arith.maximumf %101, %102 : vector<8x4xf32>
    %c134 = arith.constant 134 : index
    %c0_41 = arith.constant 0 : index
    %104 = vector.load %arg1[%c134, %c0_41] : memref<144x128xf32, #tpu.memory_space<vmem>>, vector<1x4xf32>
    %c135 = arith.constant 135 : index
    %c0_42 = arith.constant 0 : index
    %105 = vector.load %arg1[%c135, %c0_42] : memref<144x128xf32, #tpu.memory_space<vmem>>, vector<1x4xf32>
    %cst_43 = arith.constant dense<0.000000e+00> : vector<4xf32>
    %106 = vector.multi_reduction <add>, %103, %cst_43 [0] : vector<8x4xf32> to vector<4xf32>
    %107 = vector.shape_cast %106 : vector<4xf32> to vector<1x4xf32>
    %cst_44 = arith.constant 8.000000e+00 : f32
    %108 = vector.broadcast %cst_44 : f32 to vector<1x4xf32>
    %109 = arith.divf %107, %108 : vector<1x4xf32>
    %110 = arith.mulf %103, %103 : vector<8x4xf32>
    %cst_45 = arith.constant dense<0.000000e+00> : vector<4xf32>
    %111 = vector.multi_reduction <add>, %110, %cst_45 [0] : vector<8x4xf32> to vector<4xf32>
    %112 = vector.shape_cast %111 : vector<4xf32> to vector<1x4xf32>
    %cst_46 = arith.constant 8.000000e+00 : f32
    %113 = vector.broadcast %cst_46 : f32 to vector<1x4xf32>
    %114 = arith.divf %112, %113 : vector<1x4xf32>
    %115 = arith.mulf %109, %109 : vector<1x4xf32>
    %116 = arith.subf %114, %115 : vector<1x4xf32>
    %cst_47 = arith.constant 0.000000e+00 : f32
    %117 = vector.broadcast %cst_47 : f32 to vector<1x4xf32>
    %118 = arith.maximumf %116, %117 : vector<1x4xf32>
    %cst_48 = arith.constant 9.99999974E-6 : f32
    %119 = vector.broadcast %cst_48 : f32 to vector<1x4xf32>
    %120 = arith.addf %118, %119 : vector<1x4xf32>
    %121 = math.rsqrt %120 : vector<1x4xf32>
    %122 = arith.mulf %104, %121 : vector<1x4xf32>
    %123 = vector.broadcast %122 : vector<1x4xf32> to vector<8x4xf32>
    %124 = arith.mulf %103, %123 : vector<8x4xf32>
    %125 = arith.mulf %109, %122 : vector<1x4xf32>
    %126 = arith.subf %105, %125 : vector<1x4xf32>
    %127 = vector.broadcast %126 : vector<1x4xf32> to vector<8x4xf32>
    %128 = arith.addf %124, %127 : vector<8x4xf32>
    %c120 = arith.constant 120 : index
    %c0_49 = arith.constant 0 : index
    %129 = vector.load %arg1[%c120, %c0_49] : memref<144x128xf32, #tpu.memory_space<vmem>>, vector<4x128xf32>
    %c136 = arith.constant 136 : index
    %c0_50 = arith.constant 0 : index
    %130 = vector.load %arg1[%c136, %c0_50] : memref<144x128xf32, #tpu.memory_space<vmem>>, vector<1x128xf32>
    %cst_51 = arith.constant dense<0.000000e+00> : vector<8x128xf32>
    %131 = tpu.matmul %128, %129, %cst_51 {dimension_numbers = #tpu.dot_dimension_numbers<[1], [0], [0], [1], [0, 0, 1, 1], [], []>} : vector<8x4xf32>, vector<4x128xf32>, vector<8x128xf32> -> vector<8x128xf32>
    %132 = vector.broadcast %130 : vector<1x128xf32> to vector<8x128xf32>
    %133 = arith.addf %131, %132 : vector<8x128xf32>
    %c0_52 = arith.constant 0 : index
    %c0_53 = arith.constant 0 : index
    %134 = vector.load %arg2[%c0_52, %c0_53] : memref<8x128xf32, #tpu.memory_space<vmem>>, vector<8x128xf32>
    tpu.vector_store %arg2[%c0_52, %c0_53], %133 {strides = array<i32>} : memref<8x128xf32, #tpu.memory_space<vmem>>, vector<8x128xf32>,
    return
  }
}

</mosaic_0001>

<llo_original>
// kernel: _forward_impl.1
$region0: #{_forward_impl.1}
  #allocation0 [shape = 'u32[]', space=smem, size = 0x4, offset = 0x4, fixed_abs, tag = 'smem constant byte address 0x4 - core index']
  #allocation1 [shape = 'u32[72,128]{1,0:T(1,128)}', space=vmem, size = 0x9000, scoped, tag = 'internal scratch']
  %s0 = inlined_call_operand.hbm [shape: f32[8,64], index: 0, kind: input, shape index: {}]
  %s1 = inlined_call_operand.hbm [shape: f32[144,128], index: 1, kind: input, shape index: {}]
  %s2 = inlined_call_operand.vmem [shape: f32[8,128], index: 2, kind: output, shape index: {}]
  %s3 = sld [smem:[#allocation0]]
  $region26: #{_forward_impl.1} parent=0
    _
  %s5 = ssub.s32 1, %s3
  %s6 = scalar_select 0, %s5, %s3
  $region1: #{_forward_impl.1} parent=0
    #allocation2 [shape = 'u8[4096]{0}', space=vmem, size = 0x1000, scoped, tag = 'input window, operand 0, single buffered']
    #allocation3 [shape = 's32[1]{0}', space=sflag, size = 0x4, scoped, tag = 'scoped memory for _forward_impl.1']
    #allocation4 [shape = 'u8[73728]{0}', space=vmem, size = 0x12000, scoped, tag = 'input window, operand 1, single buffered']
    #allocation5 [shape = 's32[1]{0}', space=sflag, size = 0x4, scoped, tag = 'scoped memory for _forward_impl.1']
    %7 = vsyncpa [#allocation3], 0
    %8 = vsyncpa [#allocation5], 0
    // Predicated region
    $region2: #{_forward_impl.1} parent=1 // pred_check
      _
    $region3: #{_forward_impl.1} parent=1 // pred_check_branch
      %10 = sbr.rel (0) target = $region5
    $region4: #{_forward_impl.1} parent=1 // pred_region
      %12 = vsyncadd [#allocation3], 0
      %s14 = sshll.u32 %s0, 4
      %s15 = int_to_ptr.hbm [resolvable:$true] %s14
      %s16 = sshll.u32 [#allocation2], 4
      %s17 = int_to_ptr.vmem [resolvable:$true] %s16
      %19 = dma.hbm_to_vmem [thread:$0]  %s15, 128, %s17, [#allocation3]
    $region5: #{_forward_impl.1} parent=1 // pred_fallthru
      _
    // Predicated region
    $region6: #{_forward_impl.1} parent=1 // pred_check
      _
    $region7: #{_forward_impl.1} parent=1 // pred_check_branch
      %21 = sbr.rel (0) target = $region9
    $region8: #{_forward_impl.1} parent=1 // pred_region
      %23 = vsyncadd [#allocation5], 0
      %s24 = sshll.u32 %s1, 4
      %s25 = int_to_ptr.hbm [resolvable:$true] %s24
      %s26 = sshll.u32 [#allocation4], 4
      %s27 = int_to_ptr.vmem [resolvable:$true] %s26
      %32 = dma.hbm_to_vmem [thread:$0]  %s25, 2304, %s27, [#allocation5], 128, 128, 8
    $region9: #{_forward_impl.1} parent=1 // pred_fallthru
      _
    // Predicated region
    $region10: #{_forward_impl.1} parent=1 // pred_check
      _
    $region11: #{_forward_impl.1} parent=1 // pred_check_branch
      %34 = sbr.rel (0) target = $region13
    $region12: #{_forward_impl.1} parent=1 // pred_region
      %36 = dma.done [#allocation3], 128
    $region13: #{_forward_impl.1} parent=1 // pred_fallthru
      _
    // Predicated region
    $region14: #{_forward_impl.1} parent=1 // pred_check
      _
    $region15: #{_forward_impl.1} parent=1 // pred_check_branch
      %38 = sbr.rel (0) target = $region17
    $region16: #{_forward_impl.1} parent=1 // pred_region
      %40 = dma.done [#allocation5], 2304
    $region17: #{_forward_impl.1} parent=1 // pred_fallthru
      _
    %v41 = vld [vmem:[#allocation2] sm:$0xff]
    %v42 = vld [vmem:[#allocation4] sm:$0xff]
    %v43 = vld [vmem:[#allocation4 + $0x8] sm:$0xff]
    %v44 = vld [vmem:[#allocation4 + $0x10] sm:$0xff]
    %v45 = vld [vmem:[#allocation4 + $0x18] sm:$0xff]
    %v46 = vld [vmem:[#allocation4 + $0x20] sm:$0xff]
    %v47 = vld [vmem:[#allocation4 + $0x28] sm:$0xff]
    %v48 = vld [vmem:[#allocation4 + $0x30] sm:$0xff]
    %v49 = vld [vmem:[#allocation4 + $0x38] sm:$0xff]
    %v50 = vld [vmem:[#allocation4 + $0x7c] sm:$0x1]
    %v51 = vperm.slane %v50, 0
    %vm52 = vcmask 523264
    %v54 = vsel %vm52, %v41, 0
    %56 = vmatpush.msra.mxu0 0.0
    %57 = vmatpush.msra.mxu0 0.0
    %58 = vmatpush.msra.mxu0 0.0
    %59 = vmatpush.msra.mxu0 0.0
    %60 = vmatpush.msra.mxu0 0.0
    %61 = vmatpush.msra.mxu0 0.0
    %62 = vmatpush.msra.mxu0 0.0
    %63 = vmatpush.msra.mxu0 0.0
    %64 = vmatpush.msra.mxu0 %v49
    %65 = vmatpush.msra.mxu0 %v48
    %66 = vmatpush.msra.mxu0 %v47
    %67 = vmatpush.msra.mxu0 %v46
    %68 = vmatpush.msra.mxu0 %v45
    %69 = vmatpush.msra.mxu0 %v44
    %70 = vmatpush.msra.mxu0 %v43
    %71 = vmatpush.msra.mxu0 %v42
    %72 = vmatmul.f32.gmra.mxu0 %v54
    %v73 = vpop.f32.mrf.mxu0
    %v74 = vadd.f32 %v51, %v73
    %75 = vdwg.mxu0
    %v76 = vmax.f32 %v74, 0.0
    %v77 = vld [vmem:[#allocation4 + $0x7d] sm:$0x1]
    %v78 = vld [vmem:[#allocation4 + $0x7e] sm:$0x1]
    %vm79 = vcmask 261120
    %v80 = vsel %vm79, %v76, 0.0
    %v81 = vrot.slane %v80, 4
    %v82 = vadd.f32 %v80, %v81
    %v83 = vrot.slane %v82, 2
    %v84 = vadd.f32 %v82, %v83
    %v85 = vrot.slane %v84, 1
    %v86 = vadd.f32 %v84, %v85
    %v87 = vrcp.pop 8.0
    %v88 = vmul.f32 8.0, %v87
    %v89 = vsub.f32 1.0, %v88
    %v90 = vmul.f32 %v87, %v89
    %v91 = vadd.f32 %v87, %v90
    %vm92 = vweird.f32 %v87
    %v93 = vsel %vm92, %v87, %v91
    %v94 = vmul.f32 %v86, %v93
    %v95 = vmul.f32 %v76, %v76
    %v96 = vsel %vm79, %v95, 0.0
    %v97 = vrot.slane %v96, 4
    %v98 = vadd.f32 %v96, %v97
    %v99 = vrot.slane %v98, 2
    %v100 = vadd.f32 %v98, %v99
    %v101 = vrot.slane %v100, 1
    %v102 = vadd.f32 %v100, %v101
    %v103 = vmul.f32 %v102, %v93
    %v104 = vmul.f32 %v94, %v94
    %v105 = vsub.f32 %v103, %v104
    %v106 = vmax.f32 %v105, 0.0
    %v107 = vadd.f32 %v106, 1e-05
    %v108 = vrsqrt.pop %v107
    %v109 = vmul.f32 %v108, %v107
    %v110 = vmul.f32 %v109, %v108
    %v111 = vmul.f32 0.5, %v110
    %v112 = vsub.f32 1.5, %v111
    %v113 = vmul.f32 %v108, %v112
    %vm114 = vweird.f32 %v107
    %vm115 = vweird.f32 %v108
    %vm116 = vmor %vm114, %vm115
    %v117 = vsel %vm116, %v108, %v113
    %v118 = vmul.f32 %v77, %v117
    %v119 = vperm.slane %v118, 0
    %v120 = vmul.f32 %v76, %v119
    %v121 = vmul.f32 %v94, %v118
    %v122 = vsub.f32 %v78, %v121
    %v123 = vperm.slane %v122, 0
    %v124 = vadd.f32 %v120, %v123
    %v125 = vld [vmem:[#allocation4 + $0x40] sm:$0xff]
    %v126 = vld [vmem:[#allocation4 + $0x48] sm:$0xff]
    %v127 = vld [vmem:[#allocation4 + $0x50] sm:$0xff]
    %v128 = vld [vmem:[#allocation4 + $0x58] sm:$0xff]
    %v129 = vld [vmem:[#allocation4 + $0x7f] sm:$0x1]
    %v130 = vperm.slane %v129, 0
    %v132 = vsel %vm79, %v124, 0
    %134 = vmatpush.msra.mxu0 0.0
    %135 = vmatpush.msra.mxu0 0.0
    %136 = vmatpush.msra.mxu0 0.0
    %137 = vmatpush.msra.mxu0 0.0
    %138 = vmatpush.msra.mxu0 0.0
    %139 = vmatpush.msra.mxu0 0.0
    %140 = vmatpush.msra.mxu0 0.0
    %141 = vmatpush.msra.mxu0 0.0
    %142 = vmatpush.msra.mxu0 0.0
    %143 = vmatpush.msra.mxu0 0.0
    %144 = vmatpush.msra.mxu0 0.0
    %145 = vmatpush.msra.mxu0 0.0
    %146 = vmatpush.msra.mxu0 %v128
    %147 = vmatpush.msra.mxu0 %v127
    %148 = vmatpush.msra.mxu0 %v126
    %149 = vmatpush.msra.mxu0 %v125
    %150 = vmatmul.f32.gmra.mxu0 %v132
    %v151 = vpop.f32.mrf.mxu0
    %v152 = vadd.f32 %v130, %v151
    %153 = vdwg.mxu0
    %v154 = vmax.f32 %v152, 0.0
    %v155 = vld [vmem:[#allocation4 + $0x80] sm:$0x1]
    %v156 = vld [vmem:[#allocation4 + $0x81] sm:$0x1]
    %vm157 = vcmask 130048
    %v158 = vsel %vm157, %v154, 0.0
    %v159 = vrot.slane %v158, 4
    %v160 = vadd.f32 %v158, %v159
    %v161 = vrot.slane %v160, 2
    %v162 = vadd.f32 %v160, %v161
    %v163 = vrot.slane %v162, 1
    %v164 = vadd.f32 %v162, %v163
    %v165 = vmul.f32 %v164, %v93
    %v166 = vmul.f32 %v154, %v154
    %v167 = vsel %vm157, %v166, 0.0
    %v168 = vrot.slane %v167, 4
    %v169 = vadd.f32 %v167, %v168
    %v170 = vrot.slane %v169, 2
    %v171 = vadd.f32 %v169, %v170
    %v172 = vrot.slane %v171, 1
    %v173 = vadd.f32 %v171, %v172
    %v174 = vmul.f32 %v173, %v93
    %v175 = vmul.f32 %v165, %v165
    %v176 = vsub.f32 %v174, %v175
    %v177 = vmax.f32 %v176, 0.0
    %v178 = vadd.f32 %v177, 1e-05
    %v179 = vrsqrt.pop %v178
    %v180 = vmul.f32 %v179, %v178
    %v181 = vmul.f32 %v180, %v179
    %v182 = vmul.f32 0.5, %v181
    %v183 = vsub.f32 1.5, %v182
    %v184 = vmul.f32 %v179, %v183
    %vm185 = vweird.f32 %v178
    %vm186 = vweird.f32 %v179
    %vm187 = vmor %vm185, %vm186
    %v188 = vsel %vm187, %v179, %v184
    %v189 = vmul.f32 %v155, %v188
    %v190 = vperm.slane %v189, 0
    %v191 = vmul.f32 %v154, %v190
    %v192 = vmul.f32 %v165, %v189
    %v193 = vsub.f32 %v156, %v192
    %v194 = vperm.slane %v193, 0
    %v195 = vadd.f32 %v191, %v194
    %v196 = vld [vmem:[#allocation4 + $0x60] sm:$0xff]
    %v197 = vld [vmem:[#allocation4 + $0x68] sm:$0xff]
    %v198 = vld [vmem:[#allocation4 + $0x82] sm:$0x1]
    %v199 = vperm.slane %v198, 0
    %v201 = vsel %vm157, %v195, 0
    %203 = vmatpush.msra.mxu0 0.0
    %204 = vmatpush.msra.mxu0 0.0
    %205 = vmatpush.msra.mxu0 0.0
    %206 = vmatpush.msra.mxu0 0.0
    %207 = vmatpush.msra.mxu0 0.0
    %208 = vmatpush.msra.mxu0 0.0
    %209 = vmatpush.msra.mxu0 0.0
    %210 = vmatpush.msra.mxu0 0.0
    %211 = vmatpush.msra.mxu0 0.0
    %212 = vmatpush.msra.mxu0 0.0
    %213 = vmatpush.msra.mxu0 0.0
    %214 = vmatpush.msra.mxu0 0.0
    %215 = vmatpush.msra.mxu0 0.0
    %216 = vmatpush.msra.mxu0 0.0
    %217 = vmatpush.msra.mxu0 %v197
    %218 = vmatpush.msra.mxu0 %v196
    %219 = vmatmul.f32.gmra.mxu0 %v201
    %v220 = vpop.f32.mrf.mxu0
    %v221 = vadd.f32 %v199, %v220
    %222 = vdwg.mxu0
    %v223 = vmax.f32 %v221, 0.0
    %v224 = vld [vmem:[#allocation4 + $0x83] sm:$0x1]
    %v225 = vld [vmem:[#allocation4 + $0x84] sm:$0x1]
    %vm226 = vcmask 64512
    %v227 = vsel %vm226, %v223, 0.0
    %v228 = vrot.slane %v227, 4
    %v229 = vadd.f32 %v227, %v228
    %v230 = vrot.slane %v229, 2
    %v231 = vadd.f32 %v229, %v230
    %v232 = vrot.slane %v231, 1
    %v233 = vadd.f32 %v231, %v232
    %v234 = vmul.f32 %v233, %v93
    %v235 = vmul.f32 %v223, %v223
    %v236 = vsel %vm226, %v235, 0.0
    %v237 = vrot.slane %v236, 4
    %v238 = vadd.f32 %v236, %v237
    %v239 = vrot.slane %v238, 2
    %v240 = vadd.f32 %v238, %v239
    %v241 = vrot.slane %v240, 1
    %v242 = vadd.f32 %v240, %v241
    %v243 = vmul.f32 %v242, %v93
    %v244 = vmul.f32 %v234, %v234
    %v245 = vsub.f32 %v243, %v244
    %v246 = vmax.f32 %v245, 0.0
    %v247 = vadd.f32 %v246, 1e-05
    %v248 = vrsqrt.pop %v247
    %v249 = vmul.f32 %v248, %v247
    %v250 = vmul.f32 %v249, %v248
    %v251 = vmul.f32 0.5, %v250
    %v252 = vsub.f32 1.5, %v251
    %v253 = vmul.f32 %v248, %v252
    %vm254 = vweird.f32 %v247
    %vm255 = vweird.f32 %v248
    %vm256 = vmor %vm254, %vm255
    %v257 = vsel %vm256, %v248, %v253
    %v258 = vmul.f32 %v224, %v257
    %v259 = vperm.slane %v258, 0
    %v260 = vmul.f32 %v223, %v259
    %v261 = vmul.f32 %v234, %v258
    %v262 = vsub.f32 %v225, %v261
    %v263 = vperm.slane %v262, 0
    %v264 = vadd.f32 %v260, %v263
    %v265 = vld [vmem:[#allocation4 + $0x70] sm:$0xff]
    %v266 = vld [vmem:[#allocation4 + $0x85] sm:$0x1]
    %v267 = vperm.slane %v266, 0
    %v269 = vsel %vm226, %v264, 0
    %271 = vmatpush.msra.mxu0 0.0
    %272 = vmatpush.msra.mxu0 0.0
    %273 = vmatpush.msra.mxu0 0.0
    %274 = vmatpush.msra.mxu0 0.0
    %275 = vmatpush.msra.mxu0 0.0
    %276 = vmatpush.msra.mxu0 0.0
    %277 = vmatpush.msra.mxu0 0.0
    %278 = vmatpush.msra.mxu0 0.0
    %279 = vmatpush.msra.mxu0 0.0
    %280 = vmatpush.msra.mxu0 0.0
    %281 = vmatpush.msra.mxu0 0.0
    %282 = vmatpush.msra.mxu0 0.0
    %283 = vmatpush.msra.mxu0 0.0
    %284 = vmatpush.msra.mxu0 0.0
    %285 = vmatpush.msra.mxu0 0.0
    %286 = vmatpush.msra.mxu0 %v265
    %287 = vmatmul.f32.gmra.mxu0 %v269
    %v288 = vpop.f32.mrf.mxu0
    %v289 = vadd.f32 %v267, %v288
    %290 = vdwg.mxu0
    %v291 = vmax.f32 %v289, 0.0
    %v292 = vld [vmem:[#allocation4 + $0x86] sm:$0x1]
    %v293 = vld [vmem:[#allocation4 + $0x87] sm:$0x1]
    %vm294 = vcmask 31744
    %v295 = vsel %vm294, %v291, 0.0
    %v296 = vrot.slane %v295, 4
    %v297 = vadd.f32 %v295, %v296
    %v298 = vrot.slane %v297, 2
    %v299 = vadd.f32 %v297, %v298
    %v300 = vrot.slane %v299, 1
    %v301 = vadd.f32 %v299, %v300
    %v302 = vmul.f32 %v301, %v93
    %v303 = vmul.f32 %v291, %v291
    %v304 = vsel %vm294, %v303, 0.0
    %v305 = vrot.slane %v304, 4
    %v306 = vadd.f32 %v304, %v305
    %v307 = vrot.slane %v306, 2
    %v308 = vadd.f32 %v306, %v307
    %v309 = vrot.slane %v308, 1
    %v310 = vadd.f32 %v308, %v309
    %v311 = vmul.f32 %v310, %v93
    %v312 = vmul.f32 %v302, %v302
    %v313 = vsub.f32 %v311, %v312
    %v314 = vmax.f32 %v313, 0.0
    %v315 = vadd.f32 %v314, 1e-05
    %v316 = vrsqrt.pop %v315
    %v317 = vmul.f32 %v316, %v315
    %v318 = vmul.f32 %v317, %v316
    %v319 = vmul.f32 0.5, %v318
    %v320 = vsub.f32 1.5, %v319
    %v321 = vmul.f32 %v316, %v320
    %vm322 = vweird.f32 %v315
    %vm323 = vweird.f32 %v316
    %vm324 = vmor %vm322, %vm323
    %v325 = vsel %vm324, %v316, %v321
    %v326 = vmul.f32 %v292, %v325
    %v327 = vperm.slane %v326, 0
    %v328 = vmul.f32 %v291, %v327
    %v329 = vmul.f32 %v302, %v326
    %v330 = vsub.f32 %v293, %v329
    %v331 = vperm.slane %v330, 0
    %v332 = vadd.f32 %v328, %v331
    %v333 = vld [vmem:[#allocation4 + $0x78] sm:$0xf]
    %v334 = vld [vmem:[#allocation4 + $0x88] sm:$0x1]
    %v335 = vperm.slane %v334, 0
    %v337 = vsel %vm294, %v332, 0
    %vm339 = vcmask 1043456
    %v341 = vsel %vm339, %v333, 0
    %343 = vmatpush.msra.mxu0 0.0
    %344 = vmatpush.msra.mxu0 0.0
    %345 = vmatpush.msra.mxu0 0.0
    %346 = vmatpush.msra.mxu0 0.0
    %347 = vmatpush.msra.mxu0 0.0
    %348 = vmatpush.msra.mxu0 0.0
    %349 = vmatpush.msra.mxu0 0.0
    %350 = vmatpush.msra.mxu0 0.0
    %351 = vmatpush.msra.mxu0 0.0
    %352 = vmatpush.msra.mxu0 0.0
    %353 = vmatpush.msra.mxu0 0.0
    %354 = vmatpush.msra.mxu0 0.0
    %355 = vmatpush.msra.mxu0 0.0
    %356 = vmatpush.msra.mxu0 0.0
    %357 = vmatpush.msra.mxu0 0.0
    %358 = vmatpush.msra.mxu0 %v341
    %359 = vmatmul.f32.gmra.mxu0 %v337
    %v360 = vpop.f32.mrf.mxu0
    %v361 = vadd.f32 %v335, %v360
    %362 = vdwg.mxu0
    %363 = vst [vmem:[%s2] sm:$0xff] %v361
    // Predicated region
    $region18: #{_forward_impl.1} parent=1 // pred_check
      _
    $region19: #{_forward_impl.1} parent=1 // pred_check_branch
      %365 = sbr.rel (0) target = $region21
    $region20: #{_forward_impl.1} parent=1 // pred_region
      _
    $region21: #{_forward_impl.1} parent=1 // pred_fallthru
      _
    // Predicated region
    $region22: #{_forward_impl.1} parent=1 // pred_check
      _
    $region23: #{_forward_impl.1} parent=1 // pred_check_branch
      %367 = sbr.rel (0) target = $region25
    $region24: #{_forward_impl.1} parent=1 // pred_region
      _
    $region25: #{_forward_impl.1} parent=1 // pred_fallthru
      _
    %368 = vsyncpa [#allocation3], 1
    %369 = vsyncpa [#allocation5], 1

</llo_original>
